<compile_context>
chip_gen: v7x
topology: tpu7x:2x2x1
jax: 0.10.0
libtpu: 0.0.40
codegen_flags: <defaults>
</compile_context>

<pallas_src>
import jax
import jax.numpy as jnp
from jax.experimental import pallas as pl
from jax.experimental.pallas import tpu as pltpu


def _round_up(x: int, m: int) -> int:
    return (x + m - 1) // m * m


def mlp_kernel(x_ref, w1_ref, b1_ref, w2_ref, b2_ref, o_ref):
    # fc1: bf16 MXU matmul, f32 accumulation.
    h = jnp.dot(x_ref[...].astype(jnp.bfloat16), w1_ref[...],
                preferred_element_type=jnp.float32)
    # Epilogue (bias + ReLU) in f32 — v5e's VPU has no bf16 ALU path.
    h = jnp.maximum(h + b1_ref[...], 0.0)
    # TODO(synk): training-mode dropout (p=0.5) would use pltpu.prng_seed +
    # pltpu.prng_random_bits; eval-mode forward is identity, reproduced here.
    # fc2: bf16 MXU matmul, f32 accumulation.
    y = jnp.dot(h.astype(jnp.bfloat16), w2_ref[...],
                preferred_element_type=jnp.float32)
    o_ref[...] = (y + b2_ref[...]).astype(o_ref.dtype)


def mlp_forward(x, w1, b1, w2, b2, *, tm=256):
    """y = relu(x @ w1 + b1) @ w2 + b2 (dropout in eval mode = identity).

    x : [batch, in_dim]        f32
    w1: [in_dim, hidden]       (pre-transposed vs torch)
    b1: [1, hidden]
    w2: [hidden, out_dim]      (pre-transposed vs torch)
    b2: [1, out_dim]
    """
    batch, in_dim = x.shape
    hidden = w1.shape[1]
    out_dim = w2.shape[1]

    # ---- pad to lane/sublane-friendly shapes --------------------------------
    in_pad = _round_up(in_dim, 128)
    hid_pad = _round_up(hidden, 128)
    out_pad = _round_up(out_dim, 128)
    tm = min(tm, _round_up(batch, 8))          # batch tile, multiple of 8 (f32)
    batch_pad = _round_up(batch, tm)

    if batch_pad != batch or in_pad != in_dim:
        xp = jnp.pad(x, ((0, batch_pad - batch), (0, in_pad - in_dim)))
    else:
        xp = x
    # Weights in bf16 (halves resident VMEM + doubles MXU throughput on
    # v6e/v7x); biases in f32 for the epilogue.
    w1p = jnp.pad(w1, ((0, in_pad - in_dim), (0, hid_pad - hidden))).astype(jnp.bfloat16)
    b1p = jnp.pad(b1, ((0, 0), (0, hid_pad - hidden))).astype(jnp.float32)
    w2p = jnp.pad(w2, ((0, hid_pad - hidden), (0, out_pad - out_dim))).astype(jnp.bfloat16)
    b2p = jnp.pad(b2, ((0, 0), (0, out_pad - out_dim))).astype(jnp.float32)

    # ---- VMEM budget: resident weights + double-buffered x/out tiles --------
    resident = (w1p.size * 2 + w2p.size * 2 + b1p.size * 4 + b2p.size * 4)
    streamed = 2 * tm * (in_pad * xp.dtype.itemsize + out_pad * 4)
    scratch = tm * hid_pad * 4                 # f32 intermediate h (vregs/VMEM)
    vmem_limit = int(min(64 * 1024 * 1024,     # v7x has 64 MiB VMEM per TC
                         2 * (resident + streamed + scratch) + (4 << 20)))

    grid = (batch_pad // tm,)
    out_padded = pl.pallas_call(
        mlp_kernel,
        out_shape=jax.ShapeDtypeStruct((batch_pad, out_pad), jnp.float32),
        grid_spec=pltpu.PrefetchScalarGridSpec(
            num_scalar_prefetch=0,
            grid=grid,
            in_specs=[
                pl.BlockSpec((tm, in_pad), lambda i: (i, 0)),        # x: streams per tile
                pl.BlockSpec((in_pad, hid_pad), lambda i: (0, 0)),   # W1: resident
                pl.BlockSpec((1, hid_pad), lambda i: (0, 0)),        # b1: resident
                pl.BlockSpec((hid_pad, out_pad), lambda i: (0, 0)),  # W2: resident
                pl.BlockSpec((1, out_pad), lambda i: (0, 0)),        # b2: resident
            ],
            out_specs=pl.BlockSpec((tm, out_pad), lambda i: (i, 0)),
        ),
        compiler_params=pltpu.CompilerParams(
            dimension_semantics=("parallel",),   # batch tiles are independent
            vmem_limit_bytes=vmem_limit,
        ),
    )(xp, w1p, b1p, w2p, b2p)

    return out_padded[:batch, :out_dim]


def xavier_uniform(key, fan_in, fan_out, dtype=jnp.float32):
    # matches torch.nn.init.xavier_uniform_ with gain=1
    bound = jnp.sqrt(6.0 / (fan_in + fan_out))
    return jax.random.uniform(key, (fan_in, fan_out), dtype=dtype,
                              minval=-bound, maxval=bound)


def linear_bias_init(key, fan_in, fan_out, dtype=jnp.float32):
    # matches nn.Linear default bias init: U(-1/sqrt(fan_in), 1/sqrt(fan_in))
    bound = 1.0 / jnp.sqrt(fan_in)
    return jax.random.uniform(key, (1, fan_out), dtype=dtype,
                              minval=-bound, maxval=bound)


if __name__ == "__main__":
    # Shapes consistent with the MLP forward: x of shape [batch, input_dim].
    # batch is large enough to exercise batch tiling (tm=256 -> grid=(2,)).
    batch, input_dim, hidden_dim, output_dim = 512, 32, 64, 16

    key = jax.random.PRNGKey(0)
    kx, kw1, kb1, kw2, kb2 = jax.random.split(key, 5)

    x = jax.random.normal(kx, (batch, input_dim), dtype=jnp.float32)

    # fc1: PyTorch weight shape [hidden, input]; stored transposed [input, hidden]
    w1 = xavier_uniform(kw1, input_dim, hidden_dim)
    b1 = linear_bias_init(kb1, input_dim, hidden_dim)
    # fc2: PyTorch weight shape [output, hidden]; stored transposed [hidden, output]
    w2 = xavier_uniform(kw2, hidden_dim, output_dim)
    b2 = linear_bias_init(kb2, hidden_dim, output_dim)

    out = mlp_forward(x, w1, b1, w2, b2, tm=256)
    jax.block_until_ready(out)
    assert out.shape == (batch, output_dim)

    # Pure-JAX reference matching the kernel's bf16-matmul / f32-accumulate
    # / f32-epilogue semantics.
    w1b = w1.astype(jnp.bfloat16)
    w2b = w2.astype(jnp.bfloat16)
    h_ref = jnp.dot(x.astype(jnp.bfloat16), w1b,
                    preferred_element_type=jnp.float32) + b1
    h_ref = jnp.maximum(h_ref, 0.0)
    ref = jnp.dot(h_ref.astype(jnp.bfloat16), w2b,
                  preferred_element_type=jnp.float32) + b2

    assert jnp.allclose(out, ref, atol=1e-3, rtol=1e-3), \
        float(jnp.max(jnp.abs(out - ref)))

    print("KERNEL_OK")
</pallas_src>

<mosaic_0001>
module attributes {stable_mosaic.version = 11 : i64} {
  func.func @mlp_kernel(%arg0: i32, %arg1: memref<256x128xf32, #tpu.memory_space<vmem>>, %arg2: memref<128x128xbf16, #tpu.memory_space<vmem>>, %arg3: memref<1x128xf32, #tpu.memory_space<vmem>>, %arg4: memref<128x128xbf16, #tpu.memory_space<vmem>>, %arg5: memref<1x128xf32, #tpu.memory_space<vmem>>, %arg6: memref<256x128xf32, #tpu.memory_space<vmem>>) attributes {dimension_semantics = [#tpu.dimension_semantics<parallel>], iteration_bounds = array<i64: 2>, scalar_prefetch = 0 : i64, scratch_operands = 0 : i64, tpu.core_type = #tpu.core_type<tc>, window_params = [{transform_indices = @transform_0, window_bounds = array<i64: 256, 128>}, {pipeline_mode = #tpu.pipeline_mode<synchronous>, transform_indices = @transform_1, window_bounds = array<i64: 128, 128>}, {pipeline_mode = #tpu.pipeline_mode<synchronous>, transform_indices = @transform_2, window_bounds = array<i64: 1, 128>}, {pipeline_mode = #tpu.pipeline_mode<synchronous>, transform_indices = @transform_3, window_bounds = array<i64: 128, 128>}, {pipeline_mode = #tpu.pipeline_mode<synchronous>, transform_indices = @transform_4, window_bounds = array<i64: 1, 128>}, {transform_indices = @transform_5, window_bounds = array<i64: 256, 128>}]} {
    %c0 = arith.constant 0 : index
    %c0_0 = arith.constant 0 : index
    %0 = vector.load %arg1[%c0, %c0_0] : memref<256x128xf32, #tpu.memory_space<vmem>>, vector<256x128xf32>
    %1 = arith.truncf %0 : vector<256x128xf32> to vector<256x128xbf16>
    %c0_1 = arith.constant 0 : index
    %c0_2 = arith.constant 0 : index
    %2 = vector.load %arg2[%c0_1, %c0_2] : memref<128x128xbf16, #tpu.memory_space<vmem>>, vector<128x128xbf16>
    %cst = arith.constant dense<0.000000e+00> : vector<256x128xf32>
    %3 = tpu.matmul %1, %2, %cst {dimension_numbers = #tpu.dot_dimension_numbers<[1], [0], [0], [1], [0, 0, 1, 1], [], []>} : vector<256x128xbf16>, vector<128x128xbf16>, vector<256x128xf32> -> vector<256x128xf32>
    %c0_3 = arith.constant 0 : index
    %c0_4 = arith.constant 0 : index
    %4 = vector.load %arg3[%c0_3, %c0_4] : memref<1x128xf32, #tpu.memory_space<vmem>>, vector<1x128xf32>
    %5 = vector.broadcast %4 : vector<1x128xf32> to vector<256x128xf32>
    %6 = arith.addf %3, %5 : vector<256x128xf32>
    %cst_5 = arith.constant 0.000000e+00 : f32
    %7 = vector.broadcast %cst_5 : f32 to vector<256x128xf32>
    %8 = arith.maximumf %6, %7 : vector<256x128xf32>
    %9 = arith.truncf %8 : vector<256x128xf32> to vector<256x128xbf16>
    %c0_6 = arith.constant 0 : index
    %c0_7 = arith.constant 0 : index
    %10 = vector.load %arg4[%c0_6, %c0_7] : memref<128x128xbf16, #tpu.memory_space<vmem>>, vector<128x128xbf16>
    %cst_8 = arith.constant dense<0.000000e+00> : vector<256x128xf32>
    %11 = tpu.matmul %9, %10, %cst_8 {dimension_numbers = #tpu.dot_dimension_numbers<[1], [0], [0], [1], [0, 0, 1, 1], [], []>} : vector<256x128xbf16>, vector<128x128xbf16>, vector<256x128xf32> -> vector<256x128xf32>
    %c0_9 = arith.constant 0 : index
    %c0_10 = arith.constant 0 : index
    %12 = vector.load %arg5[%c0_9, %c0_10] : memref<1x128xf32, #tpu.memory_space<vmem>>, vector<1x128xf32>
    %13 = vector.broadcast %12 : vector<1x128xf32> to vector<256x128xf32>
    %14 = arith.addf %11, %13 : vector<256x128xf32>
    %c0_11 = arith.constant 0 : index
    %c0_12 = arith.constant 0 : index
    %15 = vector.load %arg6[%c0_11, %c0_12] : memref<256x128xf32, #tpu.memory_space<vmem>>, vector<256x128xf32>
    tpu.vector_store %arg6[%c0_11, %c0_12], %14 {strides = array<i32>} : memref<256x128xf32, #tpu.memory_space<vmem>>, vector<256x128xf32>,
    return
  }
  func.func @transform_0(%arg0: i32) -> (i32, i32) {
    %c0_i32 = arith.constant 0 : i32
    %c0_i32_0 = arith.constant 0 : i32
    return %arg0, %c0_i32 : i32, i32
  }
  func.func @transform_1(%arg0: i32) -> (i32, i32) {
    %c0_i32 = arith.constant 0 : i32
    %c0_i32_0 = arith.constant 0 : i32
    %c0_i32_1 = arith.constant 0 : i32
    return %c0_i32, %c0_i32_0 : i32, i32
  }
  func.func @transform_2(%arg0: i32) -> (i32, i32) {
    %c0_i32 = arith.constant 0 : i32
    %c0_i32_0 = arith.constant 0 : i32
    %c0_i32_1 = arith.constant 0 : i32
    return %c0_i32, %c0_i32_0 : i32, i32
  }
  func.func @transform_3(%arg0: i32) -> (i32, i32) {
    %c0_i32 = arith.constant 0 : i32
    %c0_i32_0 = arith.constant 0 : i32
    %c0_i32_1 = arith.constant 0 : i32
    return %c0_i32, %c0_i32_0 : i32, i32
  }
  func.func @transform_4(%arg0: i32) -> (i32, i32) {
    %c0_i32 = arith.constant 0 : i32
    %c0_i32_0 = arith.constant 0 : i32
    %c0_i32_1 = arith.constant 0 : i32
    return %c0_i32, %c0_i32_0 : i32, i32
  }
  func.func @transform_5(%arg0: i32) -> (i32, i32) {
    %c0_i32 = arith.constant 0 : i32
    %c0_i32_0 = arith.constant 0 : i32
    return %arg0, %c0_i32 : i32, i32
  }
}

</mosaic_0001>

<llo_original>
// kernel: tpu_custom_call.1
$region0: #{tpu_custom_call.1}
  #allocation0 [shape = 'u32[]', space=smem, size = 0x4, offset = 0x4, fixed_abs, tag = 'smem constant byte address 0x4 - core index']
  #allocation1 [shape = 'u32[144,128]{1,0:T(1,128)}', space=vmem, size = 0x12000, scoped, tag = 'internal scratch']
  %s0 = inlined_call_operand.hbm [shape: f32[512,128], index: 0, kind: input, shape index: {}]
  %s1 = inlined_call_operand.hbm [shape: bf16[128,128], index: 1, kind: input, shape index: {}]
  %s2 = inlined_call_operand.vmem [shape: f32[1,128], index: 2, kind: input, shape index: {}]
  %s3 = inlined_call_operand.hbm [shape: bf16[128,128], index: 3, kind: input, shape index: {}]
  %s4 = inlined_call_operand.vmem [shape: f32[1,128], index: 4, kind: input, shape index: {}]
  %s5 = inlined_call_operand.hbm [shape: f32[512,128], index: 5, kind: output, shape index: {}]
  %s6 = sld [smem:[#allocation0]]
  $region65: #{tpu_custom_call.1} parent=0
    _
  %s8 = ssub.s32 1, %s6
  %s9 = scalar_select 0, %s8, %s6
  $region1: #{tpu_custom_call.1} parent=0
    #allocation2 [shape = 'u8[262144]{0}', space=vmem, size = 0x40000, scoped, tag = 'input window, operand 0']
    #allocation3 [shape = 's32[2]{0}', space=sflag, size = 0x8, scoped, tag = 'scoped memory for tpu_custom_call.1']
    #allocation4 [shape = 's32[2]{0}', space=sflag, size = 0x8, scoped, tag = 'scoped memory for tpu_custom_call.1']
    #allocation5 [shape = 'u8[32768]{0}', space=vmem, size = 0x8000, scoped, tag = 'input window, operand 1, single buffered']
    #allocation6 [shape = 's32[1]{0}', space=sflag, size = 0x4, scoped, tag = 'scoped memory for tpu_custom_call.1']
    #allocation7 [shape = 'u8[32768]{0}', space=vmem, size = 0x8000, scoped, tag = 'input window, operand 3, single buffered']
    #allocation8 [shape = 'u8[262144]{0}', space=vmem, size = 0x40000, scoped, tag = 'output window, operand 0']
    %10 = vsyncpa [#allocation3], 0
    %s11 = scalar_lea.sflag [#allocation3], 1
    %12 = vsyncpa %s11, 0
    %13 = vsyncpa [#allocation6], 0
    %14 = vsyncpa [#allocation4], 0
    %s15 = scalar_lea.sflag [#allocation4], 1
    %16 = vsyncpa %s15, 0
    loop: start=0, step=1, limit=4
    $region2: #{tpu_custom_call.1} parent=1 // loop_pre_header
      _
    $region3: #{tpu_custom_call.1} parent=1 // loop_header
      %s18 = sphi 0, %s22
      %p19 = scmp.ge.s32.totalorder %s18, 4
      %s28 = sphi 0, %s30
      %s31 = sphi 0, %s28
      %s32 = sphi 0, %s31
      %s48 = sphi 0, %s32
      %s52 = sphi 0, %s52
      %s54 = sphi 0, %s52
      %s55 = sphi 0, %s54
      %s69 = sphi 0, %s55
      %s73 = sphi 0, %s73
      %s75 = sphi 0, %s73
      %s76 = sphi 0, %s75
      %s90 = sphi 0, %s76
      %s94 = sphi 0, %s94
      %s96 = sphi 0, %s94
      %s97 = sphi 0, %s96
      %s111 = sphi 0, %s97
      %s115 = sphi 0, %s115
      %s117 = sphi 0, %s115
      %s118 = sphi 0, %s117
      %s132 = sphi 0, %s118
      %s138 = sphi 0, %s140
      %s141 = sphi 0, %s138
      %s142 = sphi 0, %s141
      %s158 = sphi 0, %s142
    $region4: #{tpu_custom_call.1} parent=1 // loop_header_branch
      %21 = sbr.rel (%p19) target = $region8
    $region5: #{tpu_custom_call.1} parent=1 // loop_body
      %s23 = ssub.s32 %s18, 1
      %s24 = ssub.s32 %s18, 2
      %s25 = sadd.s32 %s18, 1
      %s26 = ssub.s32 %s18, %s25
      %p27 = scmp.eq.s32.totalorder %s26, 0
      %s29 = sadd.s32 %s28, 1
      %s30 = scalar_select %p27, %s28, %s29
      %p33 = pneg %p27
      %p34 = scmp.eq.s32.totalorder %s18, 1
      %p35 = por %p33, %p34
      %p36 = scmp.ne.s32.totalorder %s28, %s31
      %p37 = scmp.eq.s32.totalorder %s18, 0
      %p38 = por %p36, %p37
      %p39 = scmp.ne.s32.totalorder %s28, %s31
      %p40 = scmp.eq.s32.totalorder %s23, 1
      %p41 = por %p39, %p40
      %p42 = scmp.ne.s32.totalorder %s31, %s32
      %p43 = scmp.eq.s32.totalorder %s23, 0
      %p44 = por %p42, %p43
      %p45 = scmp.ne.s32.totalorder %s31, %s32
      %p46 = scmp.eq.s32.totalorder %s24, 1
      %p47 = por %p45, %p46
      %p49 = scmp.ne.s32.totalorder %s32, %s48
      %p50 = scmp.eq.s32.totalorder %s24, 0
      %p51 = por %p49, %p50
      %s53 = sadd.s32 %s52, 1
      %p56 = scmp.eq.s32.totalorder %s18, 1
      %p57 = scmp.ne.s32.totalorder %s52, %s54
      %p58 = scmp.eq.s32.totalorder %s18, 0
      %p59 = por %p57, %p58
      %p60 = scmp.ne.s32.totalorder %s52, %s54
      %p61 = scmp.eq.s32.totalorder %s23, 1
      %p62 = por %p60, %p61
      %p63 = scmp.ne.s32.totalorder %s54, %s55
      %p64 = scmp.eq.s32.totalorder %s23, 0
      %p65 = por %p63, %p64
      %p66 = scmp.ne.s32.totalorder %s54, %s55
      %p67 = scmp.eq.s32.totalorder %s24, 1
      %p68 = por %p66, %p67
      %p70 = scmp.ne.s32.totalorder %s55, %s69
      %p71 = scmp.eq.s32.totalorder %s24, 0
      %p72 = por %p70, %p71
      %s74 = sadd.s32 %s73, 1
      %p77 = scmp.eq.s32.totalorder %s18, 1
      %p78 = scmp.ne.s32.totalorder %s73, %s75
      %p79 = scmp.eq.s32.totalorder %s18, 0
      %p80 = por %p78, %p79
      %p81 = scmp.ne.s32.totalorder %s73, %s75
      %p82 = scmp.eq.s32.totalorder %s23, 1
      %p83 = por %p81, %p82
      %p84 = scmp.ne.s32.totalorder %s75, %s76
      %p85 = scmp.eq.s32.totalorder %s23, 0
      %p86 = por %p84, %p85
      %p87 = scmp.ne.s32.totalorder %s75, %s76
      %p88 = scmp.eq.s32.totalorder %s24, 1
      %p89 = por %p87, %p88
      %p91 = scmp.ne.s32.totalorder %s76, %s90
      %p92 = scmp.eq.s32.totalorder %s24, 0
      %p93 = por %p91, %p92
      %s95 = sadd.s32 %s94, 1
      %p98 = scmp.eq.s32.totalorder %s18, 1
      %p99 = scmp.ne.s32.totalorder %s94, %s96
      %p100 = scmp.eq.s32.totalorder %s18, 0
      %p101 = por %p99, %p100
      %p102 = scmp.ne.s32.totalorder %s94, %s96
      %p103 = scmp.eq.s32.totalorder %s23, 1
      %p104 = por %p102, %p103
      %p105 = scmp.ne.s32.totalorder %s96, %s97
      %p106 = scmp.eq.s32.totalorder %s23, 0
      %p107 = por %p105, %p106
      %p108 = scmp.ne.s32.totalorder %s96, %s97
      %p109 = scmp.eq.s32.totalorder %s24, 1
      %p110 = por %p108, %p109
      %p112 = scmp.ne.s32.totalorder %s97, %s111
      %p113 = scmp.eq.s32.totalorder %s24, 0
      %p114 = por %p112, %p113
      %s116 = sadd.s32 %s115, 1
      %p119 = scmp.eq.s32.totalorder %s18, 1
      %p120 = scmp.ne.s32.totalorder %s115, %s117
      %p121 = scmp.eq.s32.totalorder %s18, 0
      %p122 = por %p120, %p121
      %p123 = scmp.ne.s32.totalorder %s115, %s117
      %p124 = scmp.eq.s32.totalorder %s23, 1
      %p125 = por %p123, %p124
      %p126 = scmp.ne.s32.totalorder %s117, %s118
      %p127 = scmp.eq.s32.totalorder %s23, 0
      %p128 = por %p126, %p127
      %p129 = scmp.ne.s32.totalorder %s117, %s118
      %p130 = scmp.eq.s32.totalorder %s24, 1
      %p131 = por %p129, %p130
      %p133 = scmp.ne.s32.totalorder %s118, %s132
      %p134 = scmp.eq.s32.totalorder %s24, 0
      %p135 = por %p133, %p134
      %s136 = ssub.s32 %s18, %s25
      %p137 = scmp.eq.s32.totalorder %s136, 0
      %s139 = sadd.s32 %s138, 1
      %s140 = scalar_select %p137, %s138, %s139
      %p143 = pneg %p137
      %p144 = scmp.eq.s32.totalorder %s18, 1
      %p145 = por %p143, %p144
      %p146 = scmp.ne.s32.totalorder %s138, %s141
      %p147 = scmp.eq.s32.totalorder %s18, 0
      %p148 = por %p146, %p147
      %p149 = scmp.ne.s32.totalorder %s138, %s141
      %p150 = scmp.eq.s32.totalorder %s23, 1
      %p151 = por %p149, %p150
      %p152 = scmp.ne.s32.totalorder %s141, %s142
      %p153 = scmp.eq.s32.totalorder %s23, 0
      %p154 = por %p152, %p153
      %p155 = scmp.ne.s32.totalorder %s141, %s142
      %p156 = scmp.eq.s32.totalorder %s24, 1
      %p157 = por %p155, %p156
      %p159 = scmp.ne.s32.totalorder %s142, %s158
      %p160 = scmp.eq.s32.totalorder %s24, 0
      %p161 = por %p159, %p160
      %p162 = scmp.le.s32.totalorder 1, %s18
      %p163 = scmp.lt.s32.totalorder %s18, 3
      %p164 = pnand %p162, %p163
      %p165 = pneg %p164
      // Predicated region
      $region9: #{tpu_custom_call.1} parent=5 // pred_check
        _
      $region10: #{tpu_custom_call.1} parent=5 // pred_check_branch
        %167 = sbr.rel (%p164) target = $region12
      $region11: #{tpu_custom_call.1} parent=5 // pred_region
        %s168 = ssub.s32 %s18, 1
        // Predicated region
        $region13: #{tpu_custom_call.1} parent=11 // pred_check
          %p169 = pneg %p65
        $region14: #{tpu_custom_call.1} parent=11 // pred_check_branch
          %171 = sbr.rel (%p169) target = $region16
        $region15: #{tpu_custom_call.1} parent=11 // pred_region
          %s173 = ssub.s32 1024, 1024
          %174 = vsyncadd [#allocation6], %s173
          %s175 = sshll.u32 [#allocation5], 4
          %s176 = int_to_ptr.vmem [resolvable:$true] %s175
          %181 = dma.hbm_to_vmem [thread:$0]  %s1, 1024, %s176, [#allocation6], 64, 64, 4
        $region16: #{tpu_custom_call.1} parent=11 // pred_fallthru
          _
        // Predicated region
        $region17: #{tpu_custom_call.1} parent=11 // pred_check
          %p182 = pneg %p86
        $region18: #{tpu_custom_call.1} parent=11 // pred_check_branch
          %184 = sbr.rel (%p182) target = $region20
        $region19: #{tpu_custom_call.1} parent=11 // pred_region
          _
        $region20: #{tpu_custom_call.1} parent=11 // pred_fallthru
          _
        // Predicated region
        $region21: #{tpu_custom_call.1} parent=11 // pred_check
          %p185 = pneg %p107
        $region22: #{tpu_custom_call.1} parent=11 // pred_check_branch
          %187 = sbr.rel (%p185) target = $region24
        $region23: #{tpu_custom_call.1} parent=11 // pred_region
          %s189 = ssub.s32 1024, 1024
          %190 = vsyncadd [#allocation6], %s189
          %s191 = sshll.u32 [#allocation7], 4
          %s192 = int_to_ptr.vmem [resolvable:$true] %s191
          %197 = dma.hbm_to_vmem [thread:$0]  %s3, 1024, %s192, [#allocation6], 64, 64, 4
        $region24: #{tpu_custom_call.1} parent=11 // pred_fallthru
          _
        // Predicated region
        $region25: #{tpu_custom_call.1} parent=11 // pred_check
          %p198 = pneg %p128
        $region26: #{tpu_custom_call.1} parent=11 // pred_check_branch
          %200 = sbr.rel (%p198) target = $region28
        $region27: #{tpu_custom_call.1} parent=11 // pred_region
          _
        $region28: #{tpu_custom_call.1} parent=11 // pred_fallthru
          _
      $region12: #{tpu_custom_call.1} parent=5 // pred_fallthru
        _
      %p201 = scmp.lt.s32.totalorder %s18, 2
      // Predicated region
      $region29: #{tpu_custom_call.1} parent=5 // pred_check
        %p202 = pneg %p201
      $region30: #{tpu_custom_call.1} parent=5 // pred_check_branch
        %204 = sbr.rel (%p202) target = $region32
      $region31: #{tpu_custom_call.1} parent=5 // pred_region
        // Predicated region
        $region33: #{tpu_custom_call.1} parent=31 // pred_check
          %p205 = pneg %p38
        $region34: #{tpu_custom_call.1} parent=31 // pred_check_branch
          %207 = sbr.rel (%p205) target = $region36
        $region35: #{tpu_custom_call.1} parent=31 // pred_region
          %s208 = sand.u32 %s28, 1
          %s209 = scalar_lea.sflag [#allocation3], %s208
          %s210 = sand.u32 %s28, 1
          %s211 = smul.addr %s210, 256
          %s212 = scalar_lea.vmem [#allocation2], %s211
          %s213 = smul.u32 32, %s18
          %s215 = ssub.s32 4096, 4096
          %216 = vsyncadd %s209, %s215
          %s217 = smul.addr %s213, 128
          %s218 = scalar_lea.hbm %s0, %s217
          %s219 = sshll.u32 %s212, 4
          %s220 = int_to_ptr.vmem [resolvable:$true] %s219
          %225 = dma.hbm_to_vmem [thread:$0]  %s218, 4096, %s220, %s209, 128, 128, 8
        $region36: #{tpu_custom_call.1} parent=31 // pred_fallthru
          _
      $region32: #{tpu_custom_call.1} parent=5 // pred_fallthru
        _
      %p226 = scmp.le.s32.totalorder 1, %s18
      %p227 = scmp.lt.s32.totalorder %s18, 3
      %p228 = pnand %p226, %p227
      %p229 = pneg %p228
      // Predicated region
      $region37: #{tpu_custom_call.1} parent=5 // pred_check
        _
      $region38: #{tpu_custom_call.1} parent=5 // pred_check_branch
        %231 = sbr.rel (%p228) target = $region40
      $region39: #{tpu_custom_call.1} parent=5 // pred_region
        %s232 = ssub.s32 %s18, 1
        %s233 = sand.u32 %s31, 1
        %s234 = scalar_lea.sflag [#allocation3], %s233
        %s235 = sand.u32 %s31, 1
        %s236 = smul.addr %s235, 256
        %s237 = scalar_lea.vmem [#allocation2], %s236
        // Predicated region
        $region41: #{tpu_custom_call.1} parent=39 // pred_check
          %p238 = pneg %p44
        $region42: #{tpu_custom_call.1} parent=39 // pred_check_branch
          %240 = sbr.rel (%p238) target = $region44
        $region43: #{tpu_custom_call.1} parent=39 // pred_region
          %241 = dma.done %s234, 4096
        $region44: #{tpu_custom_call.1} parent=39 // pred_fallthru
          _
        // Predicated region
        $region45: #{tpu_custom_call.1} parent=39 // pred_check
          %p242 = pneg %p65
        $region46: #{tpu_custom_call.1} parent=39 // pred_check_branch
          %244 = sbr.rel (%p242) target = $region48
        $region47: #{tpu_custom_call.1} parent=39 // pred_region
          %245 = dma.done [#allocation6], 1024
        $region48: #{tpu_custom_call.1} parent=39 // pred_fallthru
          _
        // Predicated region
        $region49: #{tpu_custom_call.1} parent=39 // pred_check
          %p246 = pneg %p107
        $region50: #{tpu_custom_call.1} parent=39 // pred_check_branch
          %248 = sbr.rel (%p246) target = $region52
        $region51: #{tpu_custom_call.1} parent=39 // pred_region
          %249 = dma.done [#allocation6], 1024
        $region52: #{tpu_custom_call.1} parent=39 // pred_fallthru
          _
        %s250 = sand.u32 %s31, 1
        %s251 = scalar_lea.sflag [#allocation3], %s250
        %s252 = sand.u32 %s31, 1
        %s253 = smul.addr %s252, 256
        %s254 = scalar_lea.vmem [#allocation2], %s253
        %p255 = pneg %p44
        %p256 = pneg %p41
        %p257 = pneg %p65
        %p258 = pneg %p62
        %p259 = pneg %p86
        %p260 = pneg %p83
        %p261 = pneg %p107
        %p262 = pneg %p104
        %p263 = pneg %p128
        %p264 = pneg %p125
        %p265 = pneg %p154
        %p266 = pneg %p151
        %s267 = sand.u32 %s141, 1
        %s268 = scalar_lea.sflag [#allocation4], %s267
        %s269 = sand.u32 %s141, 1
        %s270 = smul.addr %s269, 256
        %s271 = scalar_lea.vmem [#allocation8], %s270
        %s272 = smul.u32 32, %s23
        %s273 = smul.u32 32, %s23
        %v275 = vld [vmem:[%s237] sm:$0xff]
        %v276 = vld [vmem:[%s237 + $0x8] sm:$0xff]
        %v277 = vld [vmem:[%s237 + $0x10] sm:$0xff]
        %v278 = vld [vmem:[%s237 + $0x18] sm:$0xff]
        %v279 = vld [vmem:[%s237 + $0x20] sm:$0xff]
        %v280 = vld [vmem:[%s237 + $0x28] sm:$0xff]
        %v281 = vld [vmem:[%s237 + $0x30] sm:$0xff]
        %v282 = vld [vmem:[%s237 + $0x38] sm:$0xff]
        %v283 = vld [vmem:[%s237 + $0x40] sm:$0xff]
        %v284 = vld [vmem:[%s237 + $0x48] sm:$0xff]
        %v285 = vld [vmem:[%s237 + $0x50] sm:$0xff]
        %v286 = vld [vmem:[%s237 + $0x58] sm:$0xff]
        %v287 = vld [vmem:[%s237 + $0x60] sm:$0xff]
        %v288 = vld [vmem:[%s237 + $0x68] sm:$0xff]
        %v289 = vld [vmem:[%s237 + $0x70] sm:$0xff]
        %v290 = vld [vmem:[%s237 + $0x78] sm:$0xff]
        %v291 = vld [vmem:[%s237 + $0x80] sm:$0xff]
        %v292 = vld [vmem:[%s237 + $0x88] sm:$0xff]
        %v293 = vld [vmem:[%s237 + $0x90] sm:$0xff]
        %v294 = vld [vmem:[%s237 + $0x98] sm:$0xff]
        %v295 = vld [vmem:[%s237 + $0xa0] sm:$0xff]
        %v296 = vld [vmem:[%s237 + $0xa8] sm:$0xff]
        %v297 = vld [vmem:[%s237 + $0xb0] sm:$0xff]
        %v298 = vld [vmem:[%s237 + $0xb8] sm:$0xff]
        %v299 = vld [vmem:[%s237 + $0xc0] sm:$0xff]
        %v300 = vld [vmem:[%s237 + $0xc8] sm:$0xff]
        %v301 = vld [vmem:[%s237 + $0xd0] sm:$0xff]
        %v302 = vld [vmem:[%s237 + $0xd8] sm:$0xff]
        %v303 = vld [vmem:[%s237 + $0xe0] sm:$0xff]
        %v304 = vld [vmem:[%s237 + $0xe8] sm:$0xff]
        %v305 = vld [vmem:[%s237 + $0xf0] sm:$0xff]
        %v306 = vld [vmem:[%s237 + $0xf8] sm:$0xff]
        %v307 = vpack.c.bf16 %v276, %v275
        %v308 = vpack.c.bf16 %v278, %v277
        %v309 = vpack.c.bf16 %v280, %v279
        %v310 = vpack.c.bf16 %v282, %v281
        %v311 = vpack.c.bf16 %v284, %v283
        %v312 = vpack.c.bf16 %v286, %v285
        %v313 = vpack.c.bf16 %v288, %v287
        %v314 = vpack.c.bf16 %v290, %v289
        %v315 = vpack.c.bf16 %v292, %v291
        %v316 = vpack.c.bf16 %v294, %v293
        %v317 = vpack.c.bf16 %v296, %v295
        %v318 = vpack.c.bf16 %v298, %v297
        %v319 = vpack.c.bf16 %v300, %v299
        %v320 = vpack.c.bf16 %v302, %v301
        %v321 = vpack.c.bf16 %v304, %v303
        %v322 = vpack.c.bf16 %v306, %v305
        %v323 = vld [vmem:[#allocation5] sm:$0xf]
        %v324 = vld [vmem:[#allocation5 + $0x4] sm:$0xf]
        %v325 = vld [vmem:[#allocation5 + $0x8] sm:$0xf]
        %v326 = vld [vmem:[#allocation5 + $0xc] sm:$0xf]
        %v327 = vld [vmem:[#allocation5 + $0x10] sm:$0xf]
        %v328 = vld [vmem:[#allocation5 + $0x14] sm:$0xf]
        %v329 = vld [vmem:[#allocation5 + $0x18] sm:$0xf]
        %v330 = vld [vmem:[#allocation5 + $0x1c] sm:$0xf]
        %v331 = vld [vmem:[#allocation5 + $0x20] sm:$0xf]
        %v332 = vld [vmem:[#allocation5 + $0x24] sm:$0xf]
        %v333 = vld [vmem:[#allocation5 + $0x28] sm:$0xf]
        %v334 = vld [vmem:[#allocation5 + $0x2c] sm:$0xf]
        %v335 = vld [vmem:[#allocation5 + $0x30] sm:$0xf]
        %v336 = vld [vmem:[#allocation5 + $0x34] sm:$0xf]
        %v337 = vld [vmem:[#allocation5 + $0x38] sm:$0xf]
        %v338 = vld [vmem:[#allocation5 + $0x3c] sm:$0xf]
        %v339 = vld [vmem:[%s2] sm:$0x1]
        %v341 = vlaneseq
        %v342 = vshrl.u32 %v341, 7
        %v343 = vsub.s32 0, %v342
        %v344 = vrot.slane %v339, %v343
        %v362 = vunpack.c.l.b16 %v323
        %v363 = vunpack.c.l.b16 %v324
        %v364 = vunpack.c.l.b16 %v325
        %v365 = vunpack.c.l.b16 %v326
        %v366 = vunpack.c.l.b16 %v327
        %v367 = vunpack.c.l.b16 %v328
        %v368 = vunpack.c.l.b16 %v329
        %v369 = vunpack.c.l.b16 %v330
        %v370 = vunpack.c.l.b16 %v331
        %v371 = vunpack.c.l.b16 %v332
        %v372 = vunpack.c.l.b16 %v333
        %v373 = vunpack.c.l.b16 %v334
        %v374 = vunpack.c.l.b16 %v335
        %v375 = vunpack.c.l.b16 %v336
        %v376 = vunpack.c.l.b16 %v337
        %v377 = vunpack.c.l.b16 %v338
        %v378 = vpack.c.b16 %v363, %v362
        %v379 = vpack.c.b16 %v365, %v364
        %v380 = vpack.c.b16 %v367, %v366
        %v381 = vpack.c.b16 %v369, %v368
        %v382 = vpack.c.b16 %v371, %v370
        %v383 = vpack.c.b16 %v373, %v372
        %v384 = vpack.c.b16 %v375, %v374
        %v385 = vpack.c.b16 %v377, %v376
        %394 = vmatprep.subr.bf16.mxu0 0
        %395 = vmatpush1.bf16.msra.mxu0 %v378
        %396 = vmatprep.subr.bf16.mxu0 0
        %397 = vmatpush1.bf16.msra.mxu0 %v379
        %398 = vmatprep.subr.bf16.mxu0 0
        %399 = vmatpush1.bf16.msra.mxu0 %v380
        %400 = vmatprep.subr.bf16.mxu0 0
        %401 = vmatpush1.bf16.msra.mxu0 %v381
        %402 = vmatprep.subr.bf16.mxu0 0
        %403 = vmatpush1.bf16.msra.mxu0 %v382
        %404 = vmatprep.subr.bf16.mxu0 0
        %405 = vmatpush1.bf16.msra.mxu0 %v383
        %406 = vmatprep.subr.bf16.mxu0 0
        %407 = vmatpush1.bf16.msra.mxu0 %v384
        %408 = vmatprep.subr.bf16.mxu0 0
        %409 = vmatpush1.bf16.msra.mxu0 %v385
        %410 = vmatprep.subr.bf16.mxu0 0
        %411 = vmatpush1.bf16.msra.mxu0 0
        %412 = vmatprep.subr.bf16.mxu0 0
        %413 = vmatpush1.bf16.msra.mxu0 0
        %414 = vmatprep.subr.bf16.mxu0 0
        %415 = vmatpush1.bf16.msra.mxu0 0
        %416 = vmatprep.subr.bf16.mxu0 0
        %417 = vmatpush1.bf16.msra.mxu0 0
        %418 = vmatprep.subr.bf16.mxu0 0
        %419 = vmatpush1.bf16.msra.mxu0 0
        %420 = vmatprep.subr.bf16.mxu0 0
        %421 = vmatpush1.bf16.msra.mxu0 0
        %422 = vmatprep.subr.bf16.mxu0 0
        %423 = vmatpush1.bf16.msra.mxu0 0
        %424 = vmatprep.subr.bf16.mxu0 0
        %425 = vmatpush1.bf16.msra.mxu0 0
        %426 = vmatprep.mubr.bf16.mxu0 0
        %427 = vmatmul.mubr.bf16.gmra.mrb[0].mxu0 %v307
        %v428 = vpop.f32.mrb[0].mxu0
        %v429 = vadd.f32 %v344, %v428
        %v430 = vpop.f32.mrb[0].mxu0
        %v431 = vpop.f32.mrb[0].mxu0
        %v432 = vadd.f32 %v344, %v431
        %v433 = vpop.f32.mrb[0].mxu0
        %434 = vmatprep.mubr.bf16.mxu0 0
        %435 = vmatmul.mubr.bf16.gmra.mrb[0].mxu0 %v308
        %v436 = vpop.f32.mrb[0].mxu0
        %v437 = vadd.f32 %v344, %v436
        %v438 = vpop.f32.mrb[0].mxu0
        %v439 = vpop.f32.mrb[0].mxu0
        %v440 = vadd.f32 %v344, %v439
        %v441 = vpop.f32.mrb[0].mxu0
        %442 = vmatprep.mubr.bf16.mxu0 0
        %443 = vmatmul.mubr.bf16.gmra.mrb[0].mxu0 %v309
        %v444 = vpop.f32.mrb[0].mxu0
        %v445 = vadd.f32 %v344, %v444
        %v446 = vpop.f32.mrb[0].mxu0
        %v447 = vpop.f32.mrb[0].mxu0
        %v448 = vadd.f32 %v344, %v447
        %v449 = vpop.f32.mrb[0].mxu0
        %450 = vmatprep.mubr.bf16.mxu0 0
        %451 = vmatmul.mubr.bf16.gmra.mrb[0].mxu0 %v310
        %v452 = vpop.f32.mrb[0].mxu0
        %v453 = vadd.f32 %v344, %v452
        %v454 = vpop.f32.mrb[0].mxu0
        %v455 = vpop.f32.mrb[0].mxu0
        %v456 = vadd.f32 %v344, %v455
        %v457 = vpop.f32.mrb[0].mxu0
        %458 = vmatprep.mubr.bf16.mxu0 0
        %459 = vmatmul.mubr.bf16.gmra.mrb[0].mxu0 %v311
        %v460 = vpop.f32.mrb[0].mxu0
        %v461 = vadd.f32 %v344, %v460
        %v462 = vpop.f32.mrb[0].mxu0
        %v463 = vpop.f32.mrb[0].mxu0
        %v464 = vadd.f32 %v344, %v463
        %v465 = vpop.f32.mrb[0].mxu0
        %466 = vmatprep.mubr.bf16.mxu0 0
        %467 = vmatmul.mubr.bf16.gmra.mrb[0].mxu0 %v312
        %v468 = vpop.f32.mrb[0].mxu0
        %v469 = vadd.f32 %v344, %v468
        %v470 = vpop.f32.mrb[0].mxu0
        %v471 = vpop.f32.mrb[0].mxu0
        %v472 = vadd.f32 %v344, %v471
        %v473 = vpop.f32.mrb[0].mxu0
        %474 = vmatprep.mubr.bf16.mxu0 0
        %475 = vmatmul.mubr.bf16.gmra.mrb[0].mxu0 %v313
        %v476 = vpop.f32.mrb[0].mxu0
        %v477 = vadd.f32 %v344, %v476
        %v478 = vpop.f32.mrb[0].mxu0
        %v479 = vpop.f32.mrb[0].mxu0
        %v480 = vadd.f32 %v344, %v479
        %v481 = vpop.f32.mrb[0].mxu0
        %482 = vmatprep.mubr.bf16.mxu0 0
        %483 = vmatmul.mubr.bf16.gmra.mrb[0].mxu0 %v314
        %v484 = vpop.f32.mrb[0].mxu0
        %v485 = vadd.f32 %v344, %v484
        %v486 = vpop.f32.mrb[0].mxu0
        %v487 = vpop.f32.mrb[0].mxu0
        %v488 = vadd.f32 %v344, %v487
        %v489 = vpop.f32.mrb[0].mxu0
        %490 = vmatprep.mubr.bf16.mxu0 0
        %491 = vmatmul.mubr.bf16.gmra.mrb[0].mxu0 %v315
        %v492 = vpop.f32.mrb[0].mxu0
        %v493 = vadd.f32 %v344, %v492
        %v494 = vpop.f32.mrb[0].mxu0
        %v495 = vpop.f32.mrb[0].mxu0
        %v496 = vadd.f32 %v344, %v495
        %v497 = vpop.f32.mrb[0].mxu0
        %498 = vmatprep.mubr.bf16.mxu0 0
        %499 = vmatmul.mubr.bf16.gmra.mrb[0].mxu0 %v316
        %v500 = vpop.f32.mrb[0].mxu0
        %v501 = vadd.f32 %v344, %v500
        %v502 = vpop.f32.mrb[0].mxu0
        %v503 = vpop.f32.mrb[0].mxu0
        %v504 = vadd.f32 %v344, %v503
        %v505 = vpop.f32.mrb[0].mxu0
        %506 = vmatprep.mubr.bf16.mxu0 0
        %507 = vmatmul.mubr.bf16.gmra.mrb[0].mxu0 %v317
        %v508 = vpop.f32.mrb[0].mxu0
        %v509 = vadd.f32 %v344, %v508
        %v510 = vpop.f32.mrb[0].mxu0
        %v511 = vpop.f32.mrb[0].mxu0
        %v512 = vadd.f32 %v344, %v511
        %v513 = vpop.f32.mrb[0].mxu0
        %514 = vmatprep.mubr.bf16.mxu0 0
        %515 = vmatmul.mubr.bf16.gmra.mrb[0].mxu0 %v318
        %v516 = vpop.f32.mrb[0].mxu0
        %v517 = vadd.f32 %v344, %v516
        %v518 = vpop.f32.mrb[0].mxu0
        %v519 = vpop.f32.mrb[0].mxu0
        %v520 = vadd.f32 %v344, %v519
        %v521 = vpop.f32.mrb[0].mxu0
        %522 = vmatprep.mubr.bf16.mxu0 0
        %523 = vmatmul.mubr.bf16.gmra.mrb[0].mxu0 %v319
        %v524 = vpop.f32.mrb[0].mxu0
        %v525 = vadd.f32 %v344, %v524
        %v526 = vpop.f32.mrb[0].mxu0
        %v527 = vpop.f32.mrb[0].mxu0
        %v528 = vadd.f32 %v344, %v527
        %v529 = vpop.f32.mrb[0].mxu0
        %530 = vmatprep.mubr.bf16.mxu0 0
        %531 = vmatmul.mubr.bf16.gmra.mrb[0].mxu0 %v320
        %v532 = vpop.f32.mrb[0].mxu0
        %v533 = vadd.f32 %v344, %v532
        %v534 = vpop.f32.mrb[0].mxu0
        %v535 = vpop.f32.mrb[0].mxu0
        %v536 = vadd.f32 %v344, %v535
        %v537 = vpop.f32.mrb[0].mxu0
        %538 = vmatprep.mubr.bf16.mxu0 0
        %539 = vmatmul.mubr.bf16.gmra.mrb[0].mxu0 %v321
        %v540 = vpop.f32.mrb[0].mxu0
        %v541 = vadd.f32 %v344, %v540
        %v542 = vpop.f32.mrb[0].mxu0
        %v543 = vpop.f32.mrb[0].mxu0
        %v544 = vadd.f32 %v344, %v543
        %v545 = vpop.f32.mrb[0].mxu0
        %546 = vmatprep.mubr.bf16.mxu0 0
        %547 = vmatmul.mubr.bf16.gmra.mrb[0].mxu0 %v322
        %v548 = vpop.f32.mrb[0].mxu0
        %v549 = vadd.f32 %v344, %v548
        %v550 = vpop.f32.mrb[0].mxu0
        %v551 = vpop.f32.mrb[0].mxu0
        %v552 = vadd.f32 %v344, %v551
        %v553 = vpop.f32.mrb[0].mxu0
        %554 = vdwg.mxu0
        %v555 = vmax.f32 %v429, 0.0
        %v556 = vmax.f32 %v432, 0.0
        %v557 = vmax.f32 %v437, 0.0
        %v558 = vmax.f32 %v440, 0.0
        %v559 = vmax.f32 %v445, 0.0
        %v560 = vmax.f32 %v448, 0.0
        %v561 = vmax.f32 %v453, 0.0
        %v562 = vmax.f32 %v456, 0.0
        %v563 = vmax.f32 %v461, 0.0
        %v564 = vmax.f32 %v464, 0.0
        %v565 = vmax.f32 %v469, 0.0
        %v566 = vmax.f32 %v472, 0.0
        %v567 = vmax.f32 %v477, 0.0
        %v568 = vmax.f32 %v480, 0.0
        %v569 = vmax.f32 %v485, 0.0
        %v570 = vmax.f32 %v488, 0.0
        %v571 = vmax.f32 %v493, 0.0
        %v572 = vmax.f32 %v496, 0.0
        %v573 = vmax.f32 %v501, 0.0
        %v574 = vmax.f32 %v504, 0.0
        %v575 = vmax.f32 %v509, 0.0
        %v576 = vmax.f32 %v512, 0.0
        %v577 = vmax.f32 %v517, 0.0
        %v578 = vmax.f32 %v520, 0.0
        %v579 = vmax.f32 %v525, 0.0
        %v580 = vmax.f32 %v528, 0.0
        %v581 = vmax.f32 %v533, 0.0
        %v582 = vmax.f32 %v536, 0.0
        %v583 = vmax.f32 %v541, 0.0
        %v584 = vmax.f32 %v544, 0.0
        %v585 = vmax.f32 %v549, 0.0
        %v586 = vmax.f32 %v552, 0.0
        %v587 = vpack.c.bf16 %v556, %v555
        %v588 = vpack.c.bf16 %v558, %v557
        %v589 = vpack.c.bf16 %v560, %v559
        %v590 = vpack.c.bf16 %v562, %v561
        %v591 = vpack.c.bf16 %v564, %v563
        %v592 = vpack.c.bf16 %v566, %v565
        %v593 = vpack.c.bf16 %v568, %v567
        %v594 = vpack.c.bf16 %v570, %v569
        %v595 = vpack.c.bf16 %v572, %v571
        %v596 = vpack.c.bf16 %v574, %v573
        %v597 = vpack.c.bf16 %v576, %v575
        %v598 = vpack.c.bf16 %v578, %v577
        %v599 = vpack.c.bf16 %v580, %v579
        %v600 = vpack.c.bf16 %v582, %v581
        %v601 = vpack.c.bf16 %v584, %v583
        %v602 = vpack.c.bf16 %v586, %v585
        %v603 = vld [vmem:[#allocation7] sm:$0xf]
        %v604 = vld [vmem:[#allocation7 + $0x4] sm:$0xf]
        %v605 = vld [vmem:[#allocation7 + $0x8] sm:$0xf]
        %v606 = vld [vmem:[#allocation7 + $0xc] sm:$0xf]
        %v607 = vld [vmem:[#allocation7 + $0x10] sm:$0xf]
        %v608 = vld [vmem:[#allocation7 + $0x14] sm:$0xf]
        %v609 = vld [vmem:[#allocation7 + $0x18] sm:$0xf]
        %v610 = vld [vmem:[#allocation7 + $0x1c] sm:$0xf]
        %v611 = vld [vmem:[#allocation7 + $0x20] sm:$0xf]
        %v612 = vld [vmem:[#allocation7 + $0x24] sm:$0xf]
        %v613 = vld [vmem:[#allocation7 + $0x28] sm:$0xf]
        %v614 = vld [vmem:[#allocation7 + $0x2c] sm:$0xf]
        %v615 = vld [vmem:[#allocation7 + $0x30] sm:$0xf]
        %v616 = vld [vmem:[#allocation7 + $0x34] sm:$0xf]
        %v617 = vld [vmem:[#allocation7 + $0x38] sm:$0xf]
        %v618 = vld [vmem:[#allocation7 + $0x3c] sm:$0xf]
        %v619 = vld [vmem:[%s4] sm:$0x1]
        %v621 = vlaneseq
        %v622 = vshrl.u32 %v621, 7
        %v623 = vsub.s32 0, %v622
        %v624 = vrot.slane %v619, %v623
        %v642 = vunpack.c.l.b16 %v603
        %v643 = vunpack.c.l.b16 %v604
        %v644 = vunpack.c.l.b16 %v605
        %v645 = vunpack.c.l.b16 %v606
        %v646 = vunpack.c.l.b16 %v607
        %v647 = vunpack.c.l.b16 %v608
        %v648 = vunpack.c.l.b16 %v609
        %v649 = vunpack.c.l.b16 %v610
        %v650 = vunpack.c.l.b16 %v611
        %v651 = vunpack.c.l.b16 %v612
        %v652 = vunpack.c.l.b16 %v613
        %v653 = vunpack.c.l.b16 %v614
        %v654 = vunpack.c.l.b16 %v615
        %v655 = vunpack.c.l.b16 %v616
        %v656 = vunpack.c.l.b16 %v617
        %v657 = vunpack.c.l.b16 %v618
        %v658 = vpack.c.b16 %v643, %v642
        %v659 = vpack.c.b16 %v645, %v644
        %v660 = vpack.c.b16 %v647, %v646
        %v661 = vpack.c.b16 %v649, %v648
        %v662 = vpack.c.b16 %v651, %v650
        %v663 = vpack.c.b16 %v653, %v652
        %v664 = vpack.c.b16 %v655, %v654
        %v665 = vpack.c.b16 %v657, %v656
        %674 = vmatprep.subr.bf16.mxu0 0
        %675 = vmatpush1.bf16.msra.mxu0 %v658
        %676 = vmatprep.subr.bf16.mxu0 0
        %677 = vmatpush1.bf16.msra.mxu0 %v659
        %678 = vmatprep.subr.bf16.mxu0 0
        %679 = vmatpush1.bf16.msra.mxu0 %v660
        %680 = vmatprep.subr.bf16.mxu0 0
        %681 = vmatpush1.bf16.msra.mxu0 %v661
        %682 = vmatprep.subr.bf16.mxu0 0
        %683 = vmatpush1.bf16.msra.mxu0 %v662
        %684 = vmatprep.subr.bf16.mxu0 0
        %685 = vmatpush1.bf16.msra.mxu0 %v663
        %686 = vmatprep.subr.bf16.mxu0 0
        %687 = vmatpush1.bf16.msra.mxu0 %v664
        %688 = vmatprep.subr.bf16.mxu0 0
        %689 = vmatpush1.bf16.msra.mxu0 %v665
        %690 = vmatprep.subr.bf16.mxu0 0
        %691 = vmatpush1.bf16.msra.mxu0 0
        %692 = vmatprep.subr.bf16.mxu0 0
        %693 = vmatpush1.bf16.msra.mxu0 0
        %694 = vmatprep.subr.bf16.mxu0 0
        %695 = vmatpush1.bf16.msra.mxu0 0
        %696 = vmatprep.subr.bf16.mxu0 0
        %697 = vmatpush1.bf16.msra.mxu0 0
        %698 = vmatprep.subr.bf16.mxu0 0
        %699 = vmatpush1.bf16.msra.mxu0 0
        %700 = vmatprep.subr.bf16.mxu0 0
        %701 = vmatpush1.bf16.msra.mxu0 0
        %702 = vmatprep.subr.bf16.mxu0 0
        %703 = vmatpush1.bf16.msra.mxu0 0
        %704 = vmatprep.subr.bf16.mxu0 0
        %705 = vmatpush1.bf16.msra.mxu0 0
        %706 = vmatprep.mubr.bf16.mxu0 0
        %707 = vmatmul.mubr.bf16.gmra.mrb[0].mxu0 %v587
        %v708 = vpop.f32.mrb[0].mxu0
        %v709 = vadd.f32 %v624, %v708
        %v710 = vpop.f32.mrb[0].mxu0
        %v711 = vpop.f32.mrb[0].mxu0
        %v712 = vadd.f32 %v624, %v711
        %v713 = vpop.f32.mrb[0].mxu0
        %714 = vmatprep.mubr.bf16.mxu0 0
        %715 = vmatmul.mubr.bf16.gmra.mrb[0].mxu0 %v588
        %v716 = vpop.f32.mrb[0].mxu0
        %v717 = vadd.f32 %v624, %v716
        %v718 = vpop.f32.mrb[0].mxu0
        %v719 = vpop.f32.mrb[0].mxu0
        %v720 = vadd.f32 %v624, %v719
        %v721 = vpop.f32.mrb[0].mxu0
        %722 = vmatprep.mubr.bf16.mxu0 0
        %723 = vmatmul.mubr.bf16.gmra.mrb[0].mxu0 %v589
        %v724 = vpop.f32.mrb[0].mxu0
        %v725 = vadd.f32 %v624, %v724
        %v726 = vpop.f32.mrb[0].mxu0
        %v727 = vpop.f32.mrb[0].mxu0
        %v728 = vadd.f32 %v624, %v727
        %v729 = vpop.f32.mrb[0].mxu0
        %730 = vmatprep.mubr.bf16.mxu0 0
        %731 = vmatmul.mubr.bf16.gmra.mrb[0].mxu0 %v590
        %v732 = vpop.f32.mrb[0].mxu0
        %v733 = vadd.f32 %v624, %v732
        %v734 = vpop.f32.mrb[0].mxu0
        %v735 = vpop.f32.mrb[0].mxu0
        %v736 = vadd.f32 %v624, %v735
        %v737 = vpop.f32.mrb[0].mxu0
        %738 = vmatprep.mubr.bf16.mxu0 0
        %739 = vmatmul.mubr.bf16.gmra.mrb[0].mxu0 %v591
        %v740 = vpop.f32.mrb[0].mxu0
        %v741 = vadd.f32 %v624, %v740
        %v742 = vpop.f32.mrb[0].mxu0
        %v743 = vpop.f32.mrb[0].mxu0
        %v744 = vadd.f32 %v624, %v743
        %v745 = vpop.f32.mrb[0].mxu0
        %746 = vmatprep.mubr.bf16.mxu0 0
        %747 = vmatmul.mubr.bf16.gmra.mrb[0].mxu0 %v592
        %v748 = vpop.f32.mrb[0].mxu0
        %v749 = vadd.f32 %v624, %v748
        %v750 = vpop.f32.mrb[0].mxu0
        %v751 = vpop.f32.mrb[0].mxu0
        %v752 = vadd.f32 %v624, %v751
        %v753 = vpop.f32.mrb[0].mxu0
        %754 = vmatprep.mubr.bf16.mxu0 0
        %755 = vmatmul.mubr.bf16.gmra.mrb[0].mxu0 %v593
        %v756 = vpop.f32.mrb[0].mxu0
        %v757 = vadd.f32 %v624, %v756
        %v758 = vpop.f32.mrb[0].mxu0
        %v759 = vpop.f32.mrb[0].mxu0
        %v760 = vadd.f32 %v624, %v759
        %v761 = vpop.f32.mrb[0].mxu0
        %762 = vmatprep.mubr.bf16.mxu0 0
        %763 = vmatmul.mubr.bf16.gmra.mrb[0].mxu0 %v594
        %v764 = vpop.f32.mrb[0].mxu0
        %v765 = vadd.f32 %v624, %v764
        %v766 = vpop.f32.mrb[0].mxu0
        %v767 = vpop.f32.mrb[0].mxu0
        %v768 = vadd.f32 %v624, %v767
        %v769 = vpop.f32.mrb[0].mxu0
        %770 = vmatprep.mubr.bf16.mxu0 0
        %771 = vmatmul.mubr.bf16.gmra.mrb[0].mxu0 %v595
        %v772 = vpop.f32.mrb[0].mxu0
        %v773 = vadd.f32 %v624, %v772
        %v774 = vpop.f32.mrb[0].mxu0
        %v775 = vpop.f32.mrb[0].mxu0
        %v776 = vadd.f32 %v624, %v775
        %v777 = vpop.f32.mrb[0].mxu0
        %778 = vmatprep.mubr.bf16.mxu0 0
        %779 = vmatmul.mubr.bf16.gmra.mrb[0].mxu0 %v596
        %v780 = vpop.f32.mrb[0].mxu0
        %v781 = vadd.f32 %v624, %v780
        %v782 = vpop.f32.mrb[0].mxu0
        %v783 = vpop.f32.mrb[0].mxu0
        %v784 = vadd.f32 %v624, %v783
        %v785 = vpop.f32.mrb[0].mxu0
        %786 = vmatprep.mubr.bf16.mxu0 0
        %787 = vmatmul.mubr.bf16.gmra.mrb[0].mxu0 %v597
        %v788 = vpop.f32.mrb[0].mxu0
        %v789 = vadd.f32 %v624, %v788
        %v790 = vpop.f32.mrb[0].mxu0
        %v791 = vpop.f32.mrb[0].mxu0
        %v792 = vadd.f32 %v624, %v791
        %v793 = vpop.f32.mrb[0].mxu0
        %794 = vmatprep.mubr.bf16.mxu0 0
        %795 = vmatmul.mubr.bf16.gmra.mrb[0].mxu0 %v598
        %v796 = vpop.f32.mrb[0].mxu0
        %v797 = vadd.f32 %v624, %v796
        %v798 = vpop.f32.mrb[0].mxu0
        %v799 = vpop.f32.mrb[0].mxu0
        %v800 = vadd.f32 %v624, %v799
        %v801 = vpop.f32.mrb[0].mxu0
        %802 = vmatprep.mubr.bf16.mxu0 0
        %803 = vmatmul.mubr.bf16.gmra.mrb[0].mxu0 %v599
        %v804 = vpop.f32.mrb[0].mxu0
        %v805 = vadd.f32 %v624, %v804
        %v806 = vpop.f32.mrb[0].mxu0
        %v807 = vpop.f32.mrb[0].mxu0
        %v808 = vadd.f32 %v624, %v807
        %v809 = vpop.f32.mrb[0].mxu0
        %810 = vmatprep.mubr.bf16.mxu0 0
        %811 = vmatmul.mubr.bf16.gmra.mrb[0].mxu0 %v600
        %v812 = vpop.f32.mrb[0].mxu0
        %v813 = vadd.f32 %v624, %v812
        %v814 = vpop.f32.mrb[0].mxu0
        %v815 = vpop.f32.mrb[0].mxu0
        %v816 = vadd.f32 %v624, %v815
        %v817 = vpop.f32.mrb[0].mxu0
        %818 = vmatprep.mubr.bf16.mxu0 0
        %819 = vmatmul.mubr.bf16.gmra.mrb[0].mxu0 %v601
        %v820 = vpop.f32.mrb[0].mxu0
        %v821 = vadd.f32 %v624, %v820
        %v822 = vpop.f32.mrb[0].mxu0
        %v823 = vpop.f32.mrb[0].mxu0
        %v824 = vadd.f32 %v624, %v823
        %v825 = vpop.f32.mrb[0].mxu0
        %826 = vmatprep.mubr.bf16.mxu0 0
        %827 = vmatmul.mubr.bf16.gmra.mrb[0].mxu0 %v602
        %v828 = vpop.f32.mrb[0].mxu0
        %v829 = vadd.f32 %v624, %v828
        %v830 = vpop.f32.mrb[0].mxu0
        %v831 = vpop.f32.mrb[0].mxu0
        %v832 = vadd.f32 %v624, %v831
        %v833 = vpop.f32.mrb[0].mxu0
        %834 = vdwg.mxu0
        %835 = vst [vmem:[%s271] sm:$0xff] %v709
        %836 = vst [vmem:[%s271 + $0x8] sm:$0xff] %v712
        %837 = vst [vmem:[%s271 + $0x10] sm:$0xff] %v717
        %838 = vst [vmem:[%s271 + $0x18] sm:$0xff] %v720
        %839 = vst [vmem:[%s271 + $0x20] sm:$0xff] %v725
        %840 = vst [vmem:[%s271 + $0x28] sm:$0xff] %v728
        %841 = vst [vmem:[%s271 + $0x30] sm:$0xff] %v733
        %842 = vst [vmem:[%s271 + $0x38] sm:$0xff] %v736
        %843 = vst [vmem:[%s271 + $0x40] sm:$0xff] %v741
        %844 = vst [vmem:[%s271 + $0x48] sm:$0xff] %v744
        %845 = vst [vmem:[%s271 + $0x50] sm:$0xff] %v749
        %846 = vst [vmem:[%s271 + $0x58] sm:$0xff] %v752
        %847 = vst [vmem:[%s271 + $0x60] sm:$0xff] %v757
        %848 = vst [vmem:[%s271 + $0x68] sm:$0xff] %v760
        %849 = vst [vmem:[%s271 + $0x70] sm:$0xff] %v765
        %850 = vst [vmem:[%s271 + $0x78] sm:$0xff] %v768
        %851 = vst [vmem:[%s271 + $0x80] sm:$0xff] %v773
        %852 = vst [vmem:[%s271 + $0x88] sm:$0xff] %v776
        %853 = vst [vmem:[%s271 + $0x90] sm:$0xff] %v781
        %854 = vst [vmem:[%s271 + $0x98] sm:$0xff] %v784
        %855 = vst [vmem:[%s271 + $0xa0] sm:$0xff] %v789
        %856 = vst [vmem:[%s271 + $0xa8] sm:$0xff] %v792
        %857 = vst [vmem:[%s271 + $0xb0] sm:$0xff] %v797
        %858 = vst [vmem:[%s271 + $0xb8] sm:$0xff] %v800
        %859 = vst [vmem:[%s271 + $0xc0] sm:$0xff] %v805
        %860 = vst [vmem:[%s271 + $0xc8] sm:$0xff] %v808
        %861 = vst [vmem:[%s271 + $0xd0] sm:$0xff] %v813
        %862 = vst [vmem:[%s271 + $0xd8] sm:$0xff] %v816
        %863 = vst [vmem:[%s271 + $0xe0] sm:$0xff] %v821
        %864 = vst [vmem:[%s271 + $0xe8] sm:$0xff] %v824
        %865 = vst [vmem:[%s271 + $0xf0] sm:$0xff] %v829
        %866 = vst [vmem:[%s271 + $0xf8] sm:$0xff] %v832
        %s867 = sand.u32 %s141, 1
        %s868 = scalar_lea.sflag [#allocation4], %s867
        %s869 = sand.u32 %s141, 1
        %s870 = smul.addr %s869, 256
        %s871 = scalar_lea.vmem [#allocation8], %s870
        // Predicated region
        $region53: #{tpu_custom_call.1} parent=39 // pred_check
          %p872 = pneg %p151
        $region54: #{tpu_custom_call.1} parent=39 // pred_check_branch
          %874 = sbr.rel (%p872) target = $region56
        $region55: #{tpu_custom_call.1} parent=39 // pred_region
          %s875 = smul.u32 32, %s23
          %s877 = ssub.s32 4096, 4096
          %878 = vsyncadd %s868, %s877
          %s879 = smul.addr %s875, 128
          %s880 = scalar_lea.hbm %s5, %s879
          %s881 = sshll.u32 %s871, 4
          %s882 = int_to_ptr.vmem [resolvable:$true] %s881
          %887 = dma.vmem_to_hbm [thread:$0]  %s882, 4096, %s880, %s868, 128, 128, 8
        $region56: #{tpu_custom_call.1} parent=39 // pred_fallthru
          _
      $region40: #{tpu_custom_call.1} parent=5 // pred_fallthru
        _
      %p888 = scmp.le.s32.totalorder 2, %s18
      // Predicated region
      $region57: #{tpu_custom_call.1} parent=5 // pred_check
        %p889 = pneg %p888
      $region58: #{tpu_custom_call.1} parent=5 // pred_check_branch
        %891 = sbr.rel (%p889) target = $region60
      $region59: #{tpu_custom_call.1} parent=5 // pred_region
        %s892 = ssub.s32 %s18, 2
        // Predicated region
        $region61: #{tpu_custom_call.1} parent=59 // pred_check
          %p893 = pneg %p157
        $region62: #{tpu_custom_call.1} parent=59 // pred_check_branch
          %895 = sbr.rel (%p893) target = $region64
        $region63: #{tpu_custom_call.1} parent=59 // pred_region
          %s896 = sand.u32 %s142, 1
          %s897 = scalar_lea.sflag [#allocation4], %s896
          %s898 = sand.u32 %s142, 1
          %s899 = smul.addr %s898, 256
          %s900 = scalar_lea.vmem [#allocation8], %s899
          %901 = dma.done %s897, 4096
        $region64: #{tpu_custom_call.1} parent=59 // pred_fallthru
          _
      $region60: #{tpu_custom_call.1} parent=5 // pred_fallthru
        _
    $region6: #{tpu_custom_call.1} parent=1 // loop_footer
      %s22 = sadd.s32 1, %s18
    $region7: #{tpu_custom_call.1} parent=1 // loop_footer_branch
      %17 = sbr.rel target = $region3
    $region8: #{tpu_custom_call.1} parent=1 // loop_exit
      _
    %902 = vsyncpa [#allocation3], 1
    %s903 = scalar_lea.sflag [#allocation3], 1
    %904 = vsyncpa %s903, 1
    %905 = vsyncpa [#allocation6], 1
    %906 = vsyncpa [#allocation4], 1
    %s907 = scalar_lea.sflag [#allocation4], 1
    %908 = vsyncpa %s907, 1

</llo_original>
